<compile_context>
chip_gen: v7x
topology: tpu7x:2x2x1
jax: 0.10.0
libtpu: 0.0.40
codegen_flags: <defaults>
</compile_context>

<pallas_src>
import jax
import jax.numpy as jnp
from jax.experimental import pallas as pl
from jax.experimental.pallas import tpu as pltpu

_LANE = 128


def _round_up(x, m):
    return ((x + m - 1) // m) * m


def _nn2layer_kernel(x_ref, w1_ref, b1_ref, w2_ref, b2_ref, o_ref):
    # x_ref: (TB, D); w1_ref: (D, H); b1_ref: (1, H); w2_ref: (H, 1);
    # b2_ref: (1,) in SMEM; o_ref: (1, 1, TB) lane-dense output row.

    # Layer 1 on the MXU, f32 accumulation.
    h = jnp.dot(x_ref[...], w1_ref[...], preferred_element_type=jnp.float32)
    h = jax.nn.sigmoid(h + b1_ref[...])                     # (TB, H)

    # Layer 2 on the VPU: one XLU transpose puts the batch on lanes, then
    # broadcast-multiply by the w2 column and reduce over the hidden dim,
    # yielding the result directly in a lane-dense (1, TB) layout.
    ht = jnp.transpose(h)                                   # (H, TB)
    y = jnp.sum(ht * w2_ref[...], axis=0, keepdims=True)    # (1, TB)
    y = jax.nn.sigmoid(y + b2_ref[0])                       # (1, TB)

    o_ref[...] = y.reshape(o_ref.shape).astype(o_ref.dtype)


def _vmem_capacity_bytes():
    """Physical VMEM per TensorCore; conservative (v7x-sized) fallback."""
    try:
        info = pltpu.get_tpu_info()
        cap = getattr(info, "vmem_capacity_bytes", None)
        if cap:
            return int(cap)
    except Exception:
        pass
    return 64 * 1024 * 1024


def _choose_tile_rows(batch, feat, itemsize, vmem_budget, requested=None):
    """Largest batch tile (multiple of 128 lanes) that fits the VMEM budget.

    Accounts for lane padding: an x row occupies ceil(D/128)*128 lanes in VMEM,
    and the (TB, 16) hidden intermediate + its transpose/product are padded to
    128 lanes of f32 each.
    """
    padded_feat = _round_up(feat, _LANE)
    x_row_bytes = padded_feat * itemsize
    # Residents: w1 (ceil(D/8)*8 sublanes x 128 lanes, f32, double-buffered by
    # default) plus small biases / w2 / slack.
    fixed_bytes = 2 * (_round_up(feat, 8) * _LANE * 4) + (64 << 10)
    avail = max(vmem_budget - fixed_bytes, 1 << 20)
    # Per batch row: 2 double-buffered x rows + ~3 lane-padded f32 intermediates
    # + the (1, TB) f32 output double buffer.
    per_row = 2 * x_row_bytes + 3 * _LANE * 4 + 2 * 4
    tb = int(avail // per_row)
    tb = max(_LANE, (tb // _LANE) * _LANE)
    tb = min(tb, 32768)                          # sanity cap per grid step
    tb = min(tb, _round_up(batch, _LANE))        # no bigger than (rounded) batch
    if requested is not None:
        tb = min(tb, max(_LANE, _round_up(requested, _LANE)))
    return tb


def nn2layer_forward(x, w1, b1, w2, b2, *, block_rows=None):
    """Forward pass of NN2Layer.

    x:  (B, D)               (PyTorch layout; f32, or bf16 if the producer
                              already emits bf16 -- no wrapper-side cast)
    w1: (16, D), b1: (16,)   (nn.Linear(input_size, 16))
    w2: (1, 16), b2: (1,)    (nn.Linear(16, 1))
    Returns (B, 1) float32.
    """
    B, D = x.shape
    H = w1.shape[0]

    # Parameters in kernel-friendly layouts.
    w1_t = jnp.transpose(w1).astype(jnp.float32)    # (D, H)
    b1_2d = b1.reshape(1, H).astype(jnp.float32)    # (1, H)
    w2_col = w2.reshape(H, 1).astype(jnp.float32)   # (H, 1)
    b2_1 = b2.reshape(1).astype(jnp.float32)        # (1,)

    # Only run a low-precision MXU pass if x *already arrives* low-precision;
    # never cast x in the wrapper (that would add a full extra HBM pass).
    if x.dtype in (jnp.bfloat16, jnp.float16):
        w1_t = w1_t.astype(x.dtype)

    itemsize = jnp.dtype(x.dtype).itemsize

    # Generation-aware VMEM budget: ~62% of physical (v7x: ~40 MiB of 64 MiB;
    # v5e/v6e: ~80 MiB of 128 MiB), capped at 96 MiB.
    vmem_cap = _vmem_capacity_bytes()
    vmem_budget = min(int(vmem_cap * 0.625), 96 * 1024 * 1024)
    vmem_limit = min(int(vmem_cap * 0.75), vmem_budget + (8 << 20))

    TB = _choose_tile_rows(B, D, itemsize, vmem_budget, block_rows)
    num_tiles = pl.cdiv(B, TB)   # last tile may be ragged; no padding of x

    cost = pl.CostEstimate(
        flops=2 * B * D * H + 2 * B * H,
        transcendentals=B * (H + 1),
        bytes_accessed=B * D * itemsize + B * 4 + (D * H + 2 * H + 1) * 4,
    )

    out = pl.pallas_call(
        _nn2layer_kernel,
        out_shape=jax.ShapeDtypeStruct((num_tiles, 1, TB), jnp.float32),
        grid_spec=pltpu.PrefetchScalarGridSpec(
            num_scalar_prefetch=0,
            grid=(num_tiles,),
            in_specs=[
                # x streams through VMEM, one (TB, D) tile per grid step
                # (double-buffered DMA; last tile ragged).
                pl.BlockSpec((TB, D), lambda i: (i, 0)),
                # Weights/biases: constant block index -> DMA'd once, resident.
                pl.BlockSpec((D, H), lambda i: (0, 0)),
                pl.BlockSpec((1, H), lambda i: (0, 0)),
                pl.BlockSpec((H, 1), lambda i: (0, 0)),
                # Scalar bias lives in SMEM.
                pl.BlockSpec(memory_space=pltpu.MemorySpace.SMEM),
            ],
            # Lane-dense output: one (1, 1, TB) row per batch tile (TB is a
            # multiple of 128 -> unmasked vector stores).
            out_specs=pl.BlockSpec((1, 1, TB), lambda i: (i, 0, 0)),
        ),
        compiler_params=pltpu.CompilerParams(
            dimension_semantics=("parallel",),   # independent batch tiles
            vmem_limit_bytes=vmem_limit,
        ),
        cost_estimate=cost,
    )(x, w1_t, b1_2d, w2_col, b2_1)

    # (num_tiles, 1, TB) -> (num_tiles*TB, 1), drop the ragged-tail rows.
    return out.reshape(num_tiles * TB, 1)[:B]


def init_params(input_size, key):
    """Deterministic init matching PyTorch nn.Linear shapes (out, in) / (out,)."""
    k1, k2, k3, k4 = jax.random.split(key, 4)
    bound1 = 1.0 / jnp.sqrt(input_size)
    w1 = jax.random.uniform(k1, (16, input_size), jnp.float32, -bound1, bound1)
    b1 = jax.random.uniform(k2, (16,), jnp.float32, -bound1, bound1)
    bound2 = 1.0 / jnp.sqrt(16.0)
    w2 = jax.random.uniform(k3, (1, 16), jnp.float32, -bound2, bound2)
    b2 = jax.random.uniform(k4, (1,), jnp.float32, -bound2, bound2)
    return w1, b1, w2, b2


def _reference(x, w1, b1, w2, b2):
    h = jax.nn.sigmoid(x @ w1.T + b1)
    return jax.nn.sigmoid(h @ w2.T + b2)


if __name__ == "__main__":
    key = jax.random.PRNGKey(0)
    k_x, k_x2, k_p = jax.random.split(key, 3)

    batch, input_size = 8, 32
    x = jax.random.normal(k_x, (batch, input_size), jnp.float32)
    w1, b1, w2, b2 = init_params(input_size, k_p)

    out = nn2layer_forward(x, w1, b1, w2, b2)
    out = jax.block_until_ready(out)
    y_ref = _reference(x, w1, b1, w2, b2)
    assert out.shape == (batch, 1)
    assert jnp.allclose(out, y_ref, atol=1e-5), "mismatch vs reference (small batch)"

    # Exercise the multi-tile + ragged-tail path (B not a multiple of the tile,
    # no padding of x anywhere).
    batch2 = 520
    x2 = jax.random.normal(k_x2, (batch2, input_size), jnp.float32)
    out2 = nn2layer_forward(x2, w1, b1, w2, b2, block_rows=128)
    out2 = jax.block_until_ready(out2)
    y_ref2 = _reference(x2, w1, b1, w2, b2)
    assert out2.shape == (batch2, 1)
    assert jnp.allclose(out2, y_ref2, atol=1e-5), "mismatch vs reference (tiled batch)"

    print("KERNEL_OK")
</pallas_src>

<mosaic_0001>
module attributes {stable_mosaic.version = 11 : i64} {
  func.func @_nn2layer_kernel(%arg0: i32, %arg1: memref<128x32xf32, #tpu.memory_space<vmem>>, %arg2: memref<32x16xf32, #tpu.memory_space<vmem>>, %arg3: memref<1x16xf32, #tpu.memory_space<vmem>>, %arg4: memref<16x1xf32, #tpu.memory_space<vmem>>, %arg5: memref<1xf32, #tpu.memory_space<smem>>, %arg6: memref<1x1x128xf32, #tpu.memory_space<vmem>>) attributes {dimension_semantics = [#tpu.dimension_semantics<parallel>], iteration_bounds = array<i64: 1>, scalar_prefetch = 0 : i64, scratch_operands = 0 : i64, tpu.core_type = #tpu.core_type<tc>, window_params = [{transform_indices = @transform_0, window_bounds = array<i64: 128, 32>}, {pipeline_mode = #tpu.pipeline_mode<synchronous>, transform_indices = @transform_1, window_bounds = array<i64: 32, 16>}, {pipeline_mode = #tpu.pipeline_mode<synchronous>, transform_indices = @transform_2, window_bounds = array<i64: 1, 16>}, {pipeline_mode = #tpu.pipeline_mode<synchronous>, transform_indices = @transform_3, window_bounds = array<i64: 16, 1>}, {transform_indices = @transform_4, window_bounds = array<i64: 1>}, {transform_indices = @transform_5, window_bounds = array<i64: 1, 1, 128>}]} {
    %c0 = arith.constant 0 : index
    %c0_0 = arith.constant 0 : index
    %0 = vector.load %arg1[%c0, %c0_0] : memref<128x32xf32, #tpu.memory_space<vmem>>, vector<128x32xf32>
    %c0_1 = arith.constant 0 : index
    %c0_2 = arith.constant 0 : index
    %1 = vector.load %arg2[%c0_1, %c0_2] : memref<32x16xf32, #tpu.memory_space<vmem>>, vector<32x16xf32>
    %cst = arith.constant dense<0.000000e+00> : vector<128x16xf32>
    %2 = tpu.matmul %0, %1, %cst {dimension_numbers = #tpu.dot_dimension_numbers<[1], [0], [0], [1], [0, 0, 1, 1], [], []>} : vector<128x32xf32>, vector<32x16xf32>, vector<128x16xf32> -> vector<128x16xf32>
    %c0_3 = arith.constant 0 : index
    %c0_4 = arith.constant 0 : index
    %3 = vector.load %arg3[%c0_3, %c0_4] : memref<1x16xf32, #tpu.memory_space<vmem>>, vector<1x16xf32>
    %4 = vector.broadcast %3 : vector<1x16xf32> to vector<128x16xf32>
    %5 = arith.addf %2, %4 : vector<128x16xf32>
    %6 = arith.negf %5 : vector<128x16xf32>
    %7 = math.exp %6 : vector<128x16xf32>
    %cst_5 = arith.constant 1.000000e+00 : f32
    %8 = vector.broadcast %cst_5 : f32 to vector<128x16xf32>
    %9 = arith.addf %8, %7 : vector<128x16xf32>
    %10 = arith.divf %8, %9 : vector<128x16xf32>
    %11 = tpu.transpose %10, [1, 0] : vector<128x16xf32> -> vector<16x128xf32>
    %c0_6 = arith.constant 0 : index
    %c0_7 = arith.constant 0 : index
    %12 = vector.load %arg4[%c0_6, %c0_7] : memref<16x1xf32, #tpu.memory_space<vmem>>, vector<16x1xf32>
    %13 = vector.broadcast %12 : vector<16x1xf32> to vector<16x128xf32>
    %14 = arith.mulf %11, %13 : vector<16x128xf32>
    %cst_8 = arith.constant dense<0.000000e+00> : vector<128xf32>
    %15 = vector.multi_reduction <add>, %14, %cst_8 [0] : vector<16x128xf32> to vector<128xf32>
    %16 = vector.shape_cast %15 : vector<128xf32> to vector<1x128xf32>
    %c0_9 = arith.constant 0 : index
    %17 = memref.load %arg5[%c0_9] : memref<1xf32, #tpu.memory_space<smem>>
    %18 = vector.broadcast %17 : f32 to vector<1x128xf32>
    %19 = arith.addf %16, %18 : vector<1x128xf32>
    %20 = arith.negf %19 : vector<1x128xf32>
    %21 = math.exp %20 : vector<1x128xf32>
    %cst_10 = arith.constant 1.000000e+00 : f32
    %22 = vector.broadcast %cst_10 : f32 to vector<1x128xf32>
    %23 = arith.addf %22, %21 : vector<1x128xf32>
    %24 = arith.divf %22, %23 : vector<1x128xf32>
    %25 = vector.shape_cast %24 : vector<1x128xf32> to vector<1x1x128xf32>
    %c0_11 = arith.constant 0 : index
    %c0_12 = arith.constant 0 : index
    %c0_13 = arith.constant 0 : index
    %26 = vector.load %arg6[%c0_11, %c0_12, %c0_13] : memref<1x1x128xf32, #tpu.memory_space<vmem>>, vector<1x1x128xf32>
    tpu.vector_store %arg6[%c0_11, %c0_12, %c0_13], %25 {strides = array<i32>} : memref<1x1x128xf32, #tpu.memory_space<vmem>>, vector<1x1x128xf32>,
    return
  }
  func.func @transform_0(%arg0: i32) -> (i32, i32) {
    %c0_i32 = arith.constant 0 : i32
    %c0_i32_0 = arith.constant 0 : i32
    return %arg0, %c0_i32 : i32, i32
  }
  func.func @transform_1(%arg0: i32) -> (i32, i32) {
    %c0_i32 = arith.constant 0 : i32
    %c0_i32_0 = arith.constant 0 : i32
    %c0_i32_1 = arith.constant 0 : i32
    return %c0_i32, %c0_i32_0 : i32, i32
  }
  func.func @transform_2(%arg0: i32) -> (i32, i32) {
    %c0_i32 = arith.constant 0 : i32
    %c0_i32_0 = arith.constant 0 : i32
    %c0_i32_1 = arith.constant 0 : i32
    return %c0_i32, %c0_i32_0 : i32, i32
  }
  func.func @transform_3(%arg0: i32) -> (i32, i32) {
    %c0_i32 = arith.constant 0 : i32
    %c0_i32_0 = arith.constant 0 : i32
    %c0_i32_1 = arith.constant 0 : i32
    return %c0_i32, %c0_i32_0 : i32, i32
  }
  func.func @transform_4(%arg0: i32) -> i32 {
    %c0_i32 = arith.constant 0 : i32
    %c0_i32_0 = arith.constant 0 : i32
    return %c0_i32 : i32
  }
  func.func @transform_5(%arg0: i32) -> (i32, i32, i32) {
    %c0_i32 = arith.constant 0 : i32
    %c0_i32_0 = arith.constant 0 : i32
    %c0_i32_1 = arith.constant 0 : i32
    return %arg0, %c0_i32, %c0_i32_0 : i32, i32, i32
  }
}

</mosaic_0001>

<llo_original>
// kernel: tpu_custom_call.1
$region0: #{tpu_custom_call.1}
  #allocation0 [shape = 'u32[]', space=smem, size = 0x4, offset = 0x4, fixed_abs, tag = 'smem constant byte address 0x4 - core index']
  #allocation1 [shape = 'u32[144,128]{1,0:T(1,128)}', space=vmem, size = 0x12000, scoped, tag = 'internal scratch']
  #allocation2 [shape = 'f32[1]{0:T(128)S(6)}', space=smem, size = 0x200, scoped, tag = 'scoped memory for tpu_custom_call.1']
  %s0 = inlined_call_operand.vmem [shape: f32[8,32], index: 0, kind: input, shape index: {}]
  %s1 = inlined_call_operand.vmem [shape: f32[32,16], index: 1, kind: input, shape index: {}]
  %s2 = inlined_call_operand.vmem [shape: f32[1,16], index: 2, kind: input, shape index: {}]
  %s3 = inlined_call_operand.vmem [shape: f32[16,1], index: 3, kind: input, shape index: {}]
  %s4 = inlined_call_operand.<no memory space> [shape: f32[1], index: 4, kind: input, shape index: {}]
  %s5 = inlined_call_operand.hbm [shape: f32[1,1,128], index: 5, kind: output, shape index: {}]
  %s6 = sld [smem:[#allocation0]]
  $region30: #{tpu_custom_call.1} parent=0
    _
  %s8 = ssub.s32 1, %s6
  %s9 = scalar_select 0, %s8, %s6
  %10 = sst [smem:[#allocation2]] %s4
  $region1: #{tpu_custom_call.1} parent=0
    #allocation3 [shape = 'u8[512]{0}', space=vmem, size = 0x400, scoped, tag = 'output window, operand 0, single buffered']
    #allocation4 [shape = 's32[1]{0}', space=sflag, size = 0x4, scoped, tag = 'scoped memory for tpu_custom_call.1']
    %11 = vsyncpa [#allocation4], 0
    // Predicated region
    $region2: #{tpu_custom_call.1} parent=1 // pred_check
      _
    $region3: #{tpu_custom_call.1} parent=1 // pred_check_branch
      %13 = sbr.rel (0) target = $region5
    $region4: #{tpu_custom_call.1} parent=1 // pred_region
      _
    $region5: #{tpu_custom_call.1} parent=1 // pred_fallthru
      _
    // Predicated region
    $region6: #{tpu_custom_call.1} parent=1 // pred_check
      _
    $region7: #{tpu_custom_call.1} parent=1 // pred_check_branch
      %15 = sbr.rel (0) target = $region9
    $region8: #{tpu_custom_call.1} parent=1 // pred_region
      _
    $region9: #{tpu_custom_call.1} parent=1 // pred_fallthru
      _
    // Predicated region
    $region10: #{tpu_custom_call.1} parent=1 // pred_check
      _
    $region11: #{tpu_custom_call.1} parent=1 // pred_check_branch
      %17 = sbr.rel (0) target = $region13
    $region12: #{tpu_custom_call.1} parent=1 // pred_region
      _
    $region13: #{tpu_custom_call.1} parent=1 // pred_fallthru
      _
    // Predicated region
    $region14: #{tpu_custom_call.1} parent=1 // pred_check
      _
    $region15: #{tpu_custom_call.1} parent=1 // pred_check_branch
      %19 = sbr.rel (0) target = $region17
    $region16: #{tpu_custom_call.1} parent=1 // pred_region
      _
    $region17: #{tpu_custom_call.1} parent=1 // pred_fallthru
      _
    // Predicated region
    $region18: #{tpu_custom_call.1} parent=1 // pred_check
      _
    $region19: #{tpu_custom_call.1} parent=1 // pred_check_branch
      %21 = sbr.rel (0) target = $region21
    $region20: #{tpu_custom_call.1} parent=1 // pred_region
      _
    $region21: #{tpu_custom_call.1} parent=1 // pred_fallthru
      _
    %v22 = vld [vmem:[%s0] sm:$0xff]
    %v23 = vld [vmem:[%s0 + $0x8] sm:$0xff]
    %v24 = vld [vmem:[%s0 + $0x10] sm:$0xff]
    %v25 = vld [vmem:[%s0 + $0x18] sm:$0xff]
    %v26 = vld [vmem:[%s0 + $0x20] sm:$0xff]
    %v27 = vld [vmem:[%s0 + $0x28] sm:$0xff]
    %v28 = vld [vmem:[%s0 + $0x30] sm:$0xff]
    %v29 = vld [vmem:[%s0 + $0x38] sm:$0xff]
    %v30 = vld [vmem:[%s0 + $0x40] sm:$0xff]
    %v31 = vld [vmem:[%s0 + $0x48] sm:$0xff]
    %v32 = vld [vmem:[%s0 + $0x50] sm:$0xff]
    %v33 = vld [vmem:[%s0 + $0x58] sm:$0xff]
    %v34 = vld [vmem:[%s0 + $0x60] sm:$0xff]
    %v35 = vld [vmem:[%s0 + $0x68] sm:$0xff]
    %v36 = vld [vmem:[%s0 + $0x70] sm:$0xff]
    %v37 = vld [vmem:[%s0 + $0x78] sm:$0xff]
    %v38 = vld [vmem:[%s1] sm:$0xff]
    %v39 = vld [vmem:[%s1 + $0x8] sm:$0xff]
    %v40 = vld [vmem:[%s1 + $0x10] sm:$0xff]
    %v41 = vld [vmem:[%s1 + $0x18] sm:$0xff]
    %v42 = vld [vmem:[%s2] sm:$0x1]
    %v44 = vlaneseq
    %v45 = vshrl.u32 %v44, 7
    %v46 = vsub.s32 0, %v45
    %v47 = vrot.slane %v42, %v46
    %vm49 = vcmask 261120
    %v51 = vsel %vm49, %v22, 0
    %v54 = vsel %vm49, %v23, 0
    %v57 = vsel %vm49, %v24, 0
    %v60 = vsel %vm49, %v25, 0
    %v63 = vsel %vm49, %v26, 0
    %v66 = vsel %vm49, %v27, 0
    %v69 = vsel %vm49, %v28, 0
    %v72 = vsel %vm49, %v29, 0
    %v75 = vsel %vm49, %v30, 0
    %v78 = vsel %vm49, %v31, 0
    %v81 = vsel %vm49, %v32, 0
    %v84 = vsel %vm49, %v33, 0
    %v87 = vsel %vm49, %v34, 0
    %v90 = vsel %vm49, %v35, 0
    %v93 = vsel %vm49, %v36, 0
    %v96 = vsel %vm49, %v37, 0
    %98 = vmatprep.subr.mxu0 0.0
    %99 = vmatpush1.msra.mxu0 %v38
    %100 = vmatprep.subr.mxu0 0.0
    %101 = vmatpush1.msra.mxu0 %v39
    %102 = vmatprep.subr.mxu0 0.0
    %103 = vmatpush1.msra.mxu0 %v40
    %104 = vmatprep.subr.mxu0 0.0
    %105 = vmatpush1.msra.mxu0 %v41
    %106 = vmatprep.subr.mxu0 0.0
    %107 = vmatpush1.msra.mxu0 0.0
    %108 = vmatprep.subr.mxu0 0.0
    %109 = vmatpush1.msra.mxu0 0.0
    %110 = vmatprep.subr.mxu0 0.0
    %111 = vmatpush1.msra.mxu0 0.0
    %112 = vmatprep.subr.mxu0 0.0
    %113 = vmatpush1.msra.mxu0 0.0
    %114 = vmatprep.subr.mxu0 0.0
    %115 = vmatpush1.msra.mxu0 0.0
    %116 = vmatprep.subr.mxu0 0.0
    %117 = vmatpush1.msra.mxu0 0.0
    %118 = vmatprep.subr.mxu0 0.0
    %119 = vmatpush1.msra.mxu0 0.0
    %120 = vmatprep.subr.mxu0 0.0
    %121 = vmatpush1.msra.mxu0 0.0
    %122 = vmatprep.subr.mxu0 0.0
    %123 = vmatpush1.msra.mxu0 0.0
    %124 = vmatprep.subr.mxu0 0.0
    %125 = vmatpush1.msra.mxu0 0.0
    %126 = vmatprep.subr.mxu0 0.0
    %127 = vmatpush1.msra.mxu0 0.0
    %128 = vmatprep.subr.mxu0 0.0
    %129 = vmatpush1.msra.mxu0 0.0
    %130 = vmatprep.subr.mxu0 0.0
    %131 = vmatpush1.msra.mxu0 0.0
    %132 = vmatprep.subr.mxu0 0.0
    %133 = vmatpush1.msra.mxu0 0.0
    %134 = vmatprep.subr.mxu0 0.0
    %135 = vmatpush1.msra.mxu0 0.0
    %136 = vmatprep.subr.mxu0 0.0
    %137 = vmatpush1.msra.mxu0 0.0
    %138 = vmatprep.subr.mxu0 0.0
    %139 = vmatpush1.msra.mxu0 0.0
    %140 = vmatprep.subr.mxu0 0.0
    %141 = vmatpush1.msra.mxu0 0.0
    %142 = vmatprep.subr.mxu0 0.0
    %143 = vmatpush1.msra.mxu0 0.0
    %144 = vmatprep.subr.mxu0 0.0
    %145 = vmatpush1.msra.mxu0 0.0
    %146 = vmatprep.subr.mxu0 0.0
    %147 = vmatpush1.msra.mxu0 0.0
    %148 = vmatprep.subr.mxu0 0.0
    %149 = vmatpush1.msra.mxu0 0.0
    %150 = vmatprep.subr.mxu0 0.0
    %151 = vmatpush1.msra.mxu0 0.0
    %152 = vmatprep.subr.mxu0 0.0
    %153 = vmatpush1.msra.mxu0 0.0
    %154 = vmatprep.subr.mxu0 0.0
    %155 = vmatpush1.msra.mxu0 0.0
    %156 = vmatprep.subr.mxu0 0.0
    %157 = vmatpush1.msra.mxu0 0.0
    %158 = vmatprep.subr.mxu0 0.0
    %159 = vmatpush1.msra.mxu0 0.0
    %160 = vmatprep.subr.mxu0 0.0
    %161 = vmatpush1.msra.mxu0 0.0
    %162 = vmatprep.mubr.f32.mxu0 0.0
    %163 = vmatmul.mubr.f32.gmra.mrb[0].mxu0 %v51
    %v164 = vpop.f32.mrb[0].mxu0
    %v165 = vadd.f32 %v47, %v164
    %v166 = vpop.f32.mrb[0].mxu0
    %167 = vmatprep.mubr.f32.mxu0 0.0
    %168 = vmatmul.mubr.f32.gmra.mrb[0].mxu0 %v54
    %v169 = vpop.f32.mrb[0].mxu0
    %v170 = vadd.f32 %v47, %v169
    %v171 = vpop.f32.mrb[0].mxu0
    %172 = vmatprep.mubr.f32.mxu0 0.0
    %173 = vmatmul.mubr.f32.gmra.mrb[0].mxu0 %v57
    %v174 = vpop.f32.mrb[0].mxu0
    %v175 = vadd.f32 %v47, %v174
    %v176 = vpop.f32.mrb[0].mxu0
    %177 = vmatprep.mubr.f32.mxu0 0.0
    %178 = vmatmul.mubr.f32.gmra.mrb[0].mxu0 %v60
    %v179 = vpop.f32.mrb[0].mxu0
    %v180 = vadd.f32 %v47, %v179
    %v181 = vpop.f32.mrb[0].mxu0
    %182 = vmatprep.mubr.f32.mxu0 0.0
    %183 = vmatmul.mubr.f32.gmra.mrb[0].mxu0 %v63
    %v184 = vpop.f32.mrb[0].mxu0
    %v185 = vadd.f32 %v47, %v184
    %v186 = vpop.f32.mrb[0].mxu0
    %187 = vmatprep.mubr.f32.mxu0 0.0
    %188 = vmatmul.mubr.f32.gmra.mrb[0].mxu0 %v66
    %v189 = vpop.f32.mrb[0].mxu0
    %v190 = vadd.f32 %v47, %v189
    %v191 = vpop.f32.mrb[0].mxu0
    %192 = vmatprep.mubr.f32.mxu0 0.0
    %193 = vmatmul.mubr.f32.gmra.mrb[0].mxu0 %v69
    %v194 = vpop.f32.mrb[0].mxu0
    %v195 = vadd.f32 %v47, %v194
    %v196 = vpop.f32.mrb[0].mxu0
    %197 = vmatprep.mubr.f32.mxu0 0.0
    %198 = vmatmul.mubr.f32.gmra.mrb[0].mxu0 %v72
    %v199 = vpop.f32.mrb[0].mxu0
    %v200 = vadd.f32 %v47, %v199
    %v201 = vpop.f32.mrb[0].mxu0
    %202 = vmatprep.mubr.f32.mxu0 0.0
    %203 = vmatmul.mubr.f32.gmra.mrb[0].mxu0 %v75
    %v204 = vpop.f32.mrb[0].mxu0
    %v205 = vadd.f32 %v47, %v204
    %v206 = vpop.f32.mrb[0].mxu0
    %207 = vmatprep.mubr.f32.mxu0 0.0
    %208 = vmatmul.mubr.f32.gmra.mrb[0].mxu0 %v78
    %v209 = vpop.f32.mrb[0].mxu0
    %v210 = vadd.f32 %v47, %v209
    %v211 = vpop.f32.mrb[0].mxu0
    %212 = vmatprep.mubr.f32.mxu0 0.0
    %213 = vmatmul.mubr.f32.gmra.mrb[0].mxu0 %v81
    %v214 = vpop.f32.mrb[0].mxu0
    %v215 = vadd.f32 %v47, %v214
    %v216 = vpop.f32.mrb[0].mxu0
    %217 = vmatprep.mubr.f32.mxu0 0.0
    %218 = vmatmul.mubr.f32.gmra.mrb[0].mxu0 %v84
    %v219 = vpop.f32.mrb[0].mxu0
    %v220 = vadd.f32 %v47, %v219
    %v221 = vpop.f32.mrb[0].mxu0
    %222 = vmatprep.mubr.f32.mxu0 0.0
    %223 = vmatmul.mubr.f32.gmra.mrb[0].mxu0 %v87
    %v224 = vpop.f32.mrb[0].mxu0
    %v225 = vadd.f32 %v47, %v224
    %v226 = vpop.f32.mrb[0].mxu0
    %227 = vmatprep.mubr.f32.mxu0 0.0
    %228 = vmatmul.mubr.f32.gmra.mrb[0].mxu0 %v90
    %v229 = vpop.f32.mrb[0].mxu0
    %v230 = vadd.f32 %v47, %v229
    %v231 = vpop.f32.mrb[0].mxu0
    %232 = vmatprep.mubr.f32.mxu0 0.0
    %233 = vmatmul.mubr.f32.gmra.mrb[0].mxu0 %v93
    %v234 = vpop.f32.mrb[0].mxu0
    %v235 = vadd.f32 %v47, %v234
    %v236 = vpop.f32.mrb[0].mxu0
    %237 = vmatprep.mubr.f32.mxu0 0.0
    %238 = vmatmul.mubr.f32.gmra.mrb[0].mxu0 %v96
    %v239 = vpop.f32.mrb[0].mxu0
    %v240 = vadd.f32 %v47, %v239
    %v241 = vpop.f32.mrb[0].mxu0
    %242 = vdwg.mxu0
    %v243 = vxor.u32 %v165, 2147483648
    %v244 = vxor.u32 %v170, 2147483648
    %v245 = vxor.u32 %v175, 2147483648
    %v246 = vxor.u32 %v180, 2147483648
    %v247 = vxor.u32 %v185, 2147483648
    %v248 = vxor.u32 %v190, 2147483648
    %v249 = vxor.u32 %v195, 2147483648
    %v250 = vxor.u32 %v200, 2147483648
    %v251 = vxor.u32 %v205, 2147483648
    %v252 = vxor.u32 %v210, 2147483648
    %v253 = vxor.u32 %v215, 2147483648
    %v254 = vxor.u32 %v220, 2147483648
    %v255 = vxor.u32 %v225, 2147483648
    %v256 = vxor.u32 %v230, 2147483648
    %v257 = vxor.u32 %v235, 2147483648
    %v258 = vxor.u32 %v240, 2147483648
    %v259 = vmul.f32 %v243, 1.442695
    %v260 = vpow.pop %v259
    %v261 = vmul.f32 %v244, 1.442695
    %v262 = vpow.pop %v261
    %v263 = vmul.f32 %v245, 1.442695
    %v264 = vpow.pop %v263
    %v265 = vmul.f32 %v246, 1.442695
    %v266 = vpow.pop %v265
    %v267 = vmul.f32 %v247, 1.442695
    %v268 = vpow.pop %v267
    %v269 = vmul.f32 %v248, 1.442695
    %v270 = vpow.pop %v269
    %v271 = vmul.f32 %v249, 1.442695
    %v272 = vpow.pop %v271
    %v273 = vmul.f32 %v250, 1.442695
    %v274 = vpow.pop %v273
    %v275 = vmul.f32 %v251, 1.442695
    %v276 = vpow.pop %v275
    %v277 = vmul.f32 %v252, 1.442695
    %v278 = vpow.pop %v277
    %v279 = vmul.f32 %v253, 1.442695
    %v280 = vpow.pop %v279
    %v281 = vmul.f32 %v254, 1.442695
    %v282 = vpow.pop %v281
    %v283 = vmul.f32 %v255, 1.442695
    %v284 = vpow.pop %v283
    %v285 = vmul.f32 %v256, 1.442695
    %v286 = vpow.pop %v285
    %v287 = vmul.f32 %v257, 1.442695
    %v288 = vpow.pop %v287
    %v289 = vmul.f32 %v258, 1.442695
    %v290 = vpow.pop %v289
    %v291 = vadd.f32 %v260, 1.0
    %v292 = vadd.f32 %v262, 1.0
    %v293 = vadd.f32 %v264, 1.0
    %v294 = vadd.f32 %v266, 1.0
    %v295 = vadd.f32 %v268, 1.0
    %v296 = vadd.f32 %v270, 1.0
    %v297 = vadd.f32 %v272, 1.0
    %v298 = vadd.f32 %v274, 1.0
    %v299 = vadd.f32 %v276, 1.0
    %v300 = vadd.f32 %v278, 1.0
    %v301 = vadd.f32 %v280, 1.0
    %v302 = vadd.f32 %v282, 1.0
    %v303 = vadd.f32 %v284, 1.0
    %v304 = vadd.f32 %v286, 1.0
    %v305 = vadd.f32 %v288, 1.0
    %v306 = vadd.f32 %v290, 1.0
    %v307 = vrcp.pop %v291
    %v308 = vmul.f32 1.0, %v307
    %v309 = vrcp.pop %v292
    %v310 = vmul.f32 1.0, %v309
    %v311 = vrcp.pop %v293
    %v312 = vmul.f32 1.0, %v311
    %v313 = vrcp.pop %v294
    %v314 = vmul.f32 1.0, %v313
    %v315 = vrcp.pop %v295
    %v316 = vmul.f32 1.0, %v315
    %v317 = vrcp.pop %v296
    %v318 = vmul.f32 1.0, %v317
    %v319 = vrcp.pop %v297
    %v320 = vmul.f32 1.0, %v319
    %v321 = vrcp.pop %v298
    %v322 = vmul.f32 1.0, %v321
    %v323 = vrcp.pop %v299
    %v324 = vmul.f32 1.0, %v323
    %v325 = vrcp.pop %v300
    %v326 = vmul.f32 1.0, %v325
    %v327 = vrcp.pop %v301
    %v328 = vmul.f32 1.0, %v327
    %v329 = vrcp.pop %v302
    %v330 = vmul.f32 1.0, %v329
    %v331 = vrcp.pop %v303
    %v332 = vmul.f32 1.0, %v331
    %v333 = vrcp.pop %v304
    %v334 = vmul.f32 1.0, %v333
    %v335 = vrcp.pop %v305
    %v336 = vmul.f32 1.0, %v335
    %v337 = vrcp.pop %v306
    %v338 = vmul.f32 1.0, %v337
    %339 = vxpose.xlu0.b32.start [1/16] %v308, 128
    %340 = vxpose.xlu0.b32.cont [2/16] %v310, 128
    %341 = vxpose.xlu0.b32.cont [3/16] %v312, 128
    %342 = vxpose.xlu0.b32.cont [4/16] %v314, 128
    %343 = vxpose.xlu0.b32.cont [5/16] %v316, 128
    %344 = vxpose.xlu0.b32.cont [6/16] %v318, 128
    %345 = vxpose.xlu0.b32.cont [7/16] %v320, 128
    %346 = vxpose.xlu0.b32.cont [8/16] %v322, 128
    %347 = vxpose.xlu0.b32.cont [9/16] %v324, 128
    %348 = vxpose.xlu0.b32.cont [10/16] %v326, 128
    %349 = vxpose.xlu0.b32.cont [11/16] %v328, 128
    %350 = vxpose.xlu0.b32.cont [12/16] %v330, 128
    %351 = vxpose.xlu0.b32.cont [13/16] %v332, 128
    %352 = vxpose.xlu0.b32.cont [14/16] %v334, 128
    %353 = vxpose.xlu0.b32.cont [15/16] %v336, 128
    %354 = vxpose.xlu0.b32.end [16/16] %v338, 128
    %v355 = vpop.trf.xlu0
    %v356 = vpop.trf.xlu0
    %v357 = vpop.trf.xlu0
    %v358 = vpop.trf.xlu0
    %v359 = vpop.trf.xlu0
    %v360 = vpop.trf.xlu0
    %v361 = vpop.trf.xlu0
    %v362 = vpop.trf.xlu0
    %v363 = vpop.trf.xlu0
    %v364 = vpop.trf.xlu0
    %v365 = vpop.trf.xlu0
    %v366 = vpop.trf.xlu0
    %v367 = vpop.trf.xlu0
    %v368 = vpop.trf.xlu0
    %v369 = vpop.trf.xlu0
    %v370 = vpop.trf.xlu0
    %v371 = vld [vmem:[%s3] sm:$0xff]
    %v372 = vld [vmem:[%s3 + $0x8] sm:$0xff]
    %374 = vset.pattern.permute.xlu0 0
    %375 = vperm.xlu0 %374, %v371
    %v376 = vpop.permute.xlu0 %375
    %379 = vset.pattern.permute.xlu0 0
    %380 = vperm.xlu0 %379, %v372
    %v381 = vpop.permute.xlu0 %380
    %v383 = vmul.f32 %v355, %v376
    %v384 = vmul.f32 %v356, %v381
    %v385 = vadd.f32 %v383, %v384
    %v386 = vrot.slane %v385, 4
    %v387 = vadd.f32 %v385, %v386
    %v388 = vrot.slane %v387, 2
    %v389 = vadd.f32 %v387, %v388
    %v390 = vrot.slane %v389, 1
    %v391 = vadd.f32 %v389, %v390
    %s392 = sld [smem:[#allocation2]]
    %v393 = vstv %s392
    %v394 = vadd.f32 %v391, %v393
    %v395 = vxor.u32 %v394, 2147483648
    %v396 = vmul.f32 %v395, 1.442695
    %v397 = vpow.pop %v396
    %v398 = vadd.f32 %v397, 1.0
    %v399 = vrcp.pop %v398
    %v400 = vmul.f32 1.0, %v399
    %401 = vst [vmem:[#allocation3] sm:$0x1] %v400
    // Predicated region
    $region22: #{tpu_custom_call.1} parent=1 // pred_check
      _
    $region23: #{tpu_custom_call.1} parent=1 // pred_check_branch
      %403 = sbr.rel (0) target = $region25
    $region24: #{tpu_custom_call.1} parent=1 // pred_region
      %s405 = ssub.s32 16, 16
      %406 = vsyncadd [#allocation4], %s405
      %s408 = sshll.u32 [#allocation3], 4
      %s409 = int_to_ptr.vmem [resolvable:$true] %s408
      %411 = dma.vmem_to_hbm [thread:$0]  %s409, 16, %s5, [#allocation4]
    $region25: #{tpu_custom_call.1} parent=1 // pred_fallthru
      _
    // Predicated region
    $region26: #{tpu_custom_call.1} parent=1 // pred_check
      _
    $region27: #{tpu_custom_call.1} parent=1 // pred_check_branch
      %413 = sbr.rel (0) target = $region29
    $region28: #{tpu_custom_call.1} parent=1 // pred_region
      %414 = dma.done [#allocation4], 16
    $region29: #{tpu_custom_call.1} parent=1 // pred_fallthru
      _
    %415 = vsyncpa [#allocation4], 1

</llo_original>
